<compile_context>
chip_gen: v7x
topology: tpu7x:2x2x1
jax: 0.10.0
libtpu: 0.0.40
codegen_flags: <defaults>
</compile_context>

<pallas_src>
import functools

import jax
import jax.numpy as jnp
from jax.experimental import pallas as pl
from jax.experimental.pallas import tpu as pltpu


# ----------------------------------------------------------------------------
# Fused PALayer kernel: one grid step = one strip of tile_m pixels.
# ----------------------------------------------------------------------------
def _pa_layer_kernel(x_ref, w1_ref, b1_ref, w2_ref, b2_ref, o_ref):
    x = x_ref[...]                                   # (TM, C)  float32
    xb = x.astype(jnp.bfloat16)

    # conv1x1 (C -> C//8) + bias + ReLU   (MXU matmul, f32 accumulate)
    h = jnp.dot(xb, w1_ref[...], preferred_element_type=jnp.float32)
    h = jnp.maximum(h + b1_ref[...], 0.0)            # (TM, C//8)  f32

    # conv1x1 (C//8 -> 1) + bias + sigmoid (single matvec, f32 epilogue)
    a = jnp.dot(h.astype(jnp.bfloat16), w2_ref[...],
                preferred_element_type=jnp.float32) + b2_ref[...]   # (TM, 1)
    a = jax.nn.sigmoid(a)                            # EUP, f32

    # per-pixel attention: x * y  (y broadcast over channels), f32
    o_ref[...] = (x * a).astype(o_ref.dtype)


def pa_layer_nhwc(x, w1, b1, w2, b2, *, tile_m=512):
    """PALayer forward, channels-last.

    x : (N, H, W, C) float32
    w1: (C, C//8)   b1: (1, C//8)      (torch conv1 weight transposed, squeezed)
    w2: (C//8, 1)   b2: (1, 1)         (torch conv2 weight transposed, squeezed)
    """
    N, H, W, C = x.shape
    C8 = w1.shape[-1]
    M = N * H * W

    # flatten pixels; pad the pixel axis so it divides evenly into strips.
    xm = x.reshape(M, C)
    n_tiles = pl.cdiv(M, tile_m)
    Mp = n_tiles * tile_m
    if Mp != M:
        xm = jnp.pad(xm, ((0, Mp - M), (0, 0)))      # padded pixels sliced off below

    # wrapper-side weight cast: bf16 matmul operands, halves weight DMA.
    w1b = w1.astype(jnp.bfloat16)
    w2b = w2.astype(jnp.bfloat16)

    out = pl.pallas_call(
        _pa_layer_kernel,
        out_shape=jax.ShapeDtypeStruct((Mp, C), x.dtype),
        grid=(n_tiles,),
        in_specs=[
            pl.BlockSpec((tile_m, C), lambda i: (i, 0)),   # pixel strip
            pl.BlockSpec((C, C8), lambda i: (0, 0)),       # w1 (resident)
            pl.BlockSpec((1, C8), lambda i: (0, 0)),       # b1
            pl.BlockSpec((C8, 1), lambda i: (0, 0)),       # w2
            pl.BlockSpec((1, 1), lambda i: (0, 0)),        # b2
        ],
        out_specs=pl.BlockSpec((tile_m, C), lambda i: (i, 0)),
        compiler_params=pltpu.CompilerParams(
            dimension_semantics=("parallel",),             # strips independent (v7x: 2 TCs)
        ),
    )(xm, w1b, b1, w2b, b2)

    return out[:M].reshape(N, H, W, C)


def pa_layer_nchw(x_nchw, w1, b1, w2, b2, *, tile_m=512):
    """PALayer forward matching the PyTorch interface: x is (N, C, H, W)."""
    x = jnp.transpose(x_nchw, (0, 2, 3, 1))                # NCHW -> NHWC (glue)
    y = pa_layer_nhwc(x, w1, b1, w2, b2, tile_m=tile_m)
    return jnp.transpose(y, (0, 3, 1, 2))                  # back to NCHW


# ----------------------------------------------------------------------------
# Pure-JAX reference (f32) for correctness checking.
# ----------------------------------------------------------------------------
def pa_layer_ref_nchw(x_nchw, w1, b1, w2, b2):
    x = jnp.transpose(x_nchw, (0, 2, 3, 1))                # (N,H,W,C)
    h = jnp.maximum(jnp.einsum("nhwc,cd->nhwd", x, w1) + b1[0], 0.0)
    a = jax.nn.sigmoid(jnp.einsum("nhwd,do->nhwo", h, w2) + b2[0])
    y = x * a
    return jnp.transpose(y, (0, 3, 1, 2))


if __name__ == "__main__":
    key = jax.random.PRNGKey(0)
    kx, kw1, kb1, kw2, kb2 = jax.random.split(key, 5)

    # Small shapes consistent with the module (channel must be divisible by 8;
    # the surrounding network uses channel = 64).
    N, C, H, W = 2, 64, 16, 16
    C8 = C // 8

    x_nchw = jax.random.normal(kx, (N, C, H, W), jnp.float32)
    w1 = 0.05 * jax.random.normal(kw1, (C, C8), jnp.float32)
    b1 = 0.05 * jax.random.normal(kb1, (1, C8), jnp.float32)
    w2 = 0.05 * jax.random.normal(kw2, (C8, 1), jnp.float32)
    b2 = 0.05 * jax.random.normal(kb2, (1, 1), jnp.float32)

    fwd = jax.jit(functools.partial(pa_layer_nchw, tile_m=128))  # grid of 4 strips
    out = fwd(x_nchw, w1, b1, w2, b2)
    out = jax.block_until_ready(out)

    ref = pa_layer_ref_nchw(x_nchw, w1, b1, w2, b2)

    assert out.shape == x_nchw.shape, out.shape
    assert bool(jnp.all(jnp.isfinite(out)))
    max_err = float(jnp.max(jnp.abs(out - ref)))
    assert max_err < 2e-2, f"max abs error vs reference: {max_err}"
    print("KERNEL_OK")
</pallas_src>

<mosaic_0001>
module attributes {stable_mosaic.version = 11 : i64} {
  func.func @_pa_layer_kernel(%arg0: i32, %arg1: memref<128x64xf32, #tpu.memory_space<vmem>>, %arg2: memref<64x8xbf16, #tpu.memory_space<vmem>>, %arg3: memref<1x8xf32, #tpu.memory_space<vmem>>, %arg4: memref<8x1xbf16, #tpu.memory_space<vmem>>, %arg5: memref<1x1xf32, #tpu.memory_space<vmem>>, %arg6: memref<128x64xf32, #tpu.memory_space<vmem>>) attributes {dimension_semantics = [#tpu.dimension_semantics<parallel>], iteration_bounds = array<i64: 4>, scalar_prefetch = 0 : i64, scratch_operands = 0 : i64, tpu.core_type = #tpu.core_type<tc>, window_params = [{transform_indices = @transform_0, window_bounds = array<i64: 128, 64>}, {pipeline_mode = #tpu.pipeline_mode<synchronous>, transform_indices = @transform_1, window_bounds = array<i64: 64, 8>}, {pipeline_mode = #tpu.pipeline_mode<synchronous>, transform_indices = @transform_2, window_bounds = array<i64: 1, 8>}, {pipeline_mode = #tpu.pipeline_mode<synchronous>, transform_indices = @transform_3, window_bounds = array<i64: 8, 1>}, {pipeline_mode = #tpu.pipeline_mode<synchronous>, transform_indices = @transform_4, window_bounds = array<i64: 1, 1>}, {transform_indices = @transform_5, window_bounds = array<i64: 128, 64>}]} {
    %c0 = arith.constant 0 : index
    %c0_0 = arith.constant 0 : index
    %0 = vector.load %arg1[%c0, %c0_0] : memref<128x64xf32, #tpu.memory_space<vmem>>, vector<128x64xf32>
    %1 = arith.truncf %0 : vector<128x64xf32> to vector<128x64xbf16>
    %c0_1 = arith.constant 0 : index
    %c0_2 = arith.constant 0 : index
    %2 = vector.load %arg2[%c0_1, %c0_2] : memref<64x8xbf16, #tpu.memory_space<vmem>>, vector<64x8xbf16>
    %cst = arith.constant dense<0.000000e+00> : vector<128x8xf32>
    %3 = tpu.matmul %1, %2, %cst {dimension_numbers = #tpu.dot_dimension_numbers<[1], [0], [0], [1], [0, 0, 1, 1], [], []>} : vector<128x64xbf16>, vector<64x8xbf16>, vector<128x8xf32> -> vector<128x8xf32>
    %c0_3 = arith.constant 0 : index
    %c0_4 = arith.constant 0 : index
    %4 = vector.load %arg3[%c0_3, %c0_4] : memref<1x8xf32, #tpu.memory_space<vmem>>, vector<1x8xf32>
    %5 = vector.broadcast %4 : vector<1x8xf32> to vector<128x8xf32>
    %6 = arith.addf %3, %5 : vector<128x8xf32>
    %cst_5 = arith.constant 0.000000e+00 : f32
    %7 = vector.broadcast %cst_5 : f32 to vector<128x8xf32>
    %8 = arith.maximumf %6, %7 : vector<128x8xf32>
    %9 = arith.truncf %8 : vector<128x8xf32> to vector<128x8xbf16>
    %c0_6 = arith.constant 0 : index
    %c0_7 = arith.constant 0 : index
    %10 = vector.load %arg4[%c0_6, %c0_7] : memref<8x1xbf16, #tpu.memory_space<vmem>>, vector<8x1xbf16>
    %cst_8 = arith.constant dense<0.000000e+00> : vector<128x1xf32>
    %11 = tpu.matmul %9, %10, %cst_8 {dimension_numbers = #tpu.dot_dimension_numbers<[1], [0], [0], [1], [0, 0, 1, 1], [], []>} : vector<128x8xbf16>, vector<8x1xbf16>, vector<128x1xf32> -> vector<128x1xf32>
    %c0_9 = arith.constant 0 : index
    %c0_10 = arith.constant 0 : index
    %12 = vector.load %arg5[%c0_9, %c0_10] : memref<1x1xf32, #tpu.memory_space<vmem>>, vector<1x1xf32>
    %13 = vector.broadcast %12 : vector<1x1xf32> to vector<128x1xf32>
    %14 = arith.addf %11, %13 : vector<128x1xf32>
    %15 = arith.negf %14 : vector<128x1xf32>
    %16 = math.exp %15 : vector<128x1xf32>
    %cst_11 = arith.constant 1.000000e+00 : f32
    %17 = vector.broadcast %cst_11 : f32 to vector<128x1xf32>
    %18 = arith.addf %17, %16 : vector<128x1xf32>
    %19 = arith.divf %17, %18 : vector<128x1xf32>
    %20 = vector.broadcast %19 : vector<128x1xf32> to vector<128x64xf32>
    %21 = arith.mulf %0, %20 : vector<128x64xf32>
    %c0_12 = arith.constant 0 : index
    %c0_13 = arith.constant 0 : index
    %22 = vector.load %arg6[%c0_12, %c0_13] : memref<128x64xf32, #tpu.memory_space<vmem>>, vector<128x64xf32>
    tpu.vector_store %arg6[%c0_12, %c0_13], %21 {strides = array<i32>} : memref<128x64xf32, #tpu.memory_space<vmem>>, vector<128x64xf32>,
    return
  }
  func.func @transform_0(%arg0: i32) -> (i32, i32) {
    %c0_i32 = arith.constant 0 : i32
    %c0_i32_0 = arith.constant 0 : i32
    return %arg0, %c0_i32 : i32, i32
  }
  func.func @transform_1(%arg0: i32) -> (i32, i32) {
    %c0_i32 = arith.constant 0 : i32
    %c0_i32_0 = arith.constant 0 : i32
    %c0_i32_1 = arith.constant 0 : i32
    return %c0_i32, %c0_i32_0 : i32, i32
  }
  func.func @transform_2(%arg0: i32) -> (i32, i32) {
    %c0_i32 = arith.constant 0 : i32
    %c0_i32_0 = arith.constant 0 : i32
    %c0_i32_1 = arith.constant 0 : i32
    return %c0_i32, %c0_i32_0 : i32, i32
  }
  func.func @transform_3(%arg0: i32) -> (i32, i32) {
    %c0_i32 = arith.constant 0 : i32
    %c0_i32_0 = arith.constant 0 : i32
    %c0_i32_1 = arith.constant 0 : i32
    return %c0_i32, %c0_i32_0 : i32, i32
  }
  func.func @transform_4(%arg0: i32) -> (i32, i32) {
    %c0_i32 = arith.constant 0 : i32
    %c0_i32_0 = arith.constant 0 : i32
    %c0_i32_1 = arith.constant 0 : i32
    return %c0_i32, %c0_i32_0 : i32, i32
  }
  func.func @transform_5(%arg0: i32) -> (i32, i32) {
    %c0_i32 = arith.constant 0 : i32
    %c0_i32_0 = arith.constant 0 : i32
    return %arg0, %c0_i32 : i32, i32
  }
}

</mosaic_0001>

<llo_original>
// kernel: pa_layer_nchw.1
$region0: #{pa_layer_nchw.1}
  #allocation0 [shape = 'u32[]', space=smem, size = 0x4, offset = 0x4, fixed_abs, tag = 'smem constant byte address 0x4 - core index']
  #allocation1 [shape = 'u32[144,128]{1,0:T(1,128)}', space=vmem, size = 0x12000, scoped, tag = 'internal scratch']
  #allocation2 [shape = 'f32[1,1]{1,0:T(1,128)S(1)}', space=vmem, size = 0x200, scoped, tag = 'scoped memory for pa_layer_nchw.1']
  %s0 = inlined_call_operand.hbm [shape: f32[512,64], index: 0, kind: input, shape index: {}]
  %s1 = inlined_call_operand.vmem [shape: bf16[64,8], index: 1, kind: input, shape index: {}]
  %s2 = inlined_call_operand.vmem [shape: f32[1,8], index: 2, kind: input, shape index: {}]
  %s3 = inlined_call_operand.vmem [shape: bf16[8,1], index: 3, kind: input, shape index: {}]
  %s4 = inlined_call_operand.<no memory space> [shape: f32[1,1], index: 4, kind: input, shape index: {}]
  %s5 = inlined_call_operand.hbm [shape: f32[512,64], index: 5, kind: output, shape index: {}]
  %s6 = sld [smem:[#allocation0]]
  $region57: #{pa_layer_nchw.1} parent=0
    _
  %s8 = ssub.s32 1, %s6
  %s9 = scalar_select 0, %s8, %s6
  %v10 = vstv %s4
  %11 = vst [vmem:[#allocation2] sm:$0x1] %v10
  $region1: #{pa_layer_nchw.1} parent=0
    #allocation3 [shape = 'u8[131072]{0}', space=vmem, size = 0x20000, scoped, tag = 'input window, operand 0']
    #allocation4 [shape = 's32[2]{0}', space=sflag, size = 0x8, scoped, tag = 'scoped memory for pa_layer_nchw.1']
    #allocation5 [shape = 's32[2]{0}', space=sflag, size = 0x8, scoped, tag = 'scoped memory for pa_layer_nchw.1']
    #allocation6 [shape = 'u8[131072]{0}', space=vmem, size = 0x20000, scoped, tag = 'output window, operand 0']
    %12 = vsyncpa [#allocation4], 0
    %s13 = scalar_lea.sflag [#allocation4], 1
    %14 = vsyncpa %s13, 0
    %15 = vsyncpa [#allocation5], 0
    %s16 = scalar_lea.sflag [#allocation5], 1
    %17 = vsyncpa %s16, 0
    loop: start=0, step=1, limit=6
    $region2: #{pa_layer_nchw.1} parent=1 // loop_pre_header
      _
    $region3: #{pa_layer_nchw.1} parent=1 // loop_header
      %s19 = sphi 0, %s23
      %p20 = scmp.ge.s32.totalorder %s19, 6
      %s29 = sphi 0, %s31
      %s32 = sphi 0, %s29
      %s33 = sphi 0, %s32
      %s49 = sphi 0, %s33
      %s53 = sphi 0, %s53
      %s55 = sphi 0, %s53
      %s56 = sphi 0, %s55
      %s70 = sphi 0, %s56
      %s74 = sphi 0, %s74
      %s76 = sphi 0, %s74
      %s77 = sphi 0, %s76
      %s91 = sphi 0, %s77
      %s95 = sphi 0, %s95
      %s97 = sphi 0, %s95
      %s98 = sphi 0, %s97
      %s112 = sphi 0, %s98
      %s116 = sphi 0, %s116
      %s118 = sphi 0, %s116
      %s119 = sphi 0, %s118
      %s133 = sphi 0, %s119
      %s139 = sphi 0, %s141
      %s142 = sphi 0, %s139
      %s143 = sphi 0, %s142
      %s159 = sphi 0, %s143
    $region4: #{pa_layer_nchw.1} parent=1 // loop_header_branch
      %22 = sbr.rel (%p20) target = $region8
    $region5: #{pa_layer_nchw.1} parent=1 // loop_body
      %s24 = ssub.s32 %s19, 1
      %s25 = ssub.s32 %s19, 2
      %s26 = sadd.s32 %s19, 1
      %s27 = ssub.s32 %s19, %s26
      %p28 = scmp.eq.s32.totalorder %s27, 0
      %s30 = sadd.s32 %s29, 1
      %s31 = scalar_select %p28, %s29, %s30
      %p34 = pneg %p28
      %p35 = scmp.eq.s32.totalorder %s19, 3
      %p36 = por %p34, %p35
      %p37 = scmp.ne.s32.totalorder %s29, %s32
      %p38 = scmp.eq.s32.totalorder %s19, 0
      %p39 = por %p37, %p38
      %p40 = scmp.ne.s32.totalorder %s29, %s32
      %p41 = scmp.eq.s32.totalorder %s24, 3
      %p42 = por %p40, %p41
      %p43 = scmp.ne.s32.totalorder %s32, %s33
      %p44 = scmp.eq.s32.totalorder %s24, 0
      %p45 = por %p43, %p44
      %p46 = scmp.ne.s32.totalorder %s32, %s33
      %p47 = scmp.eq.s32.totalorder %s25, 3
      %p48 = por %p46, %p47
      %p50 = scmp.ne.s32.totalorder %s33, %s49
      %p51 = scmp.eq.s32.totalorder %s25, 0
      %p52 = por %p50, %p51
      %s54 = sadd.s32 %s53, 1
      %p57 = scmp.eq.s32.totalorder %s19, 3
      %p58 = scmp.ne.s32.totalorder %s53, %s55
      %p59 = scmp.eq.s32.totalorder %s19, 0
      %p60 = por %p58, %p59
      %p61 = scmp.ne.s32.totalorder %s53, %s55
      %p62 = scmp.eq.s32.totalorder %s24, 3
      %p63 = por %p61, %p62
      %p64 = scmp.ne.s32.totalorder %s55, %s56
      %p65 = scmp.eq.s32.totalorder %s24, 0
      %p66 = por %p64, %p65
      %p67 = scmp.ne.s32.totalorder %s55, %s56
      %p68 = scmp.eq.s32.totalorder %s25, 3
      %p69 = por %p67, %p68
      %p71 = scmp.ne.s32.totalorder %s56, %s70
      %p72 = scmp.eq.s32.totalorder %s25, 0
      %p73 = por %p71, %p72
      %s75 = sadd.s32 %s74, 1
      %p78 = scmp.eq.s32.totalorder %s19, 3
      %p79 = scmp.ne.s32.totalorder %s74, %s76
      %p80 = scmp.eq.s32.totalorder %s19, 0
      %p81 = por %p79, %p80
      %p82 = scmp.ne.s32.totalorder %s74, %s76
      %p83 = scmp.eq.s32.totalorder %s24, 3
      %p84 = por %p82, %p83
      %p85 = scmp.ne.s32.totalorder %s76, %s77
      %p86 = scmp.eq.s32.totalorder %s24, 0
      %p87 = por %p85, %p86
      %p88 = scmp.ne.s32.totalorder %s76, %s77
      %p89 = scmp.eq.s32.totalorder %s25, 3
      %p90 = por %p88, %p89
      %p92 = scmp.ne.s32.totalorder %s77, %s91
      %p93 = scmp.eq.s32.totalorder %s25, 0
      %p94 = por %p92, %p93
      %s96 = sadd.s32 %s95, 1
      %p99 = scmp.eq.s32.totalorder %s19, 3
      %p100 = scmp.ne.s32.totalorder %s95, %s97
      %p101 = scmp.eq.s32.totalorder %s19, 0
      %p102 = por %p100, %p101
      %p103 = scmp.ne.s32.totalorder %s95, %s97
      %p104 = scmp.eq.s32.totalorder %s24, 3
      %p105 = por %p103, %p104
      %p106 = scmp.ne.s32.totalorder %s97, %s98
      %p107 = scmp.eq.s32.totalorder %s24, 0
      %p108 = por %p106, %p107
      %p109 = scmp.ne.s32.totalorder %s97, %s98
      %p110 = scmp.eq.s32.totalorder %s25, 3
      %p111 = por %p109, %p110
      %p113 = scmp.ne.s32.totalorder %s98, %s112
      %p114 = scmp.eq.s32.totalorder %s25, 0
      %p115 = por %p113, %p114
      %s117 = sadd.s32 %s116, 1
      %p120 = scmp.eq.s32.totalorder %s19, 3
      %p121 = scmp.ne.s32.totalorder %s116, %s118
      %p122 = scmp.eq.s32.totalorder %s19, 0
      %p123 = por %p121, %p122
      %p124 = scmp.ne.s32.totalorder %s116, %s118
      %p125 = scmp.eq.s32.totalorder %s24, 3
      %p126 = por %p124, %p125
      %p127 = scmp.ne.s32.totalorder %s118, %s119
      %p128 = scmp.eq.s32.totalorder %s24, 0
      %p129 = por %p127, %p128
      %p130 = scmp.ne.s32.totalorder %s118, %s119
      %p131 = scmp.eq.s32.totalorder %s25, 3
      %p132 = por %p130, %p131
      %p134 = scmp.ne.s32.totalorder %s119, %s133
      %p135 = scmp.eq.s32.totalorder %s25, 0
      %p136 = por %p134, %p135
      %s137 = ssub.s32 %s19, %s26
      %p138 = scmp.eq.s32.totalorder %s137, 0
      %s140 = sadd.s32 %s139, 1
      %s141 = scalar_select %p138, %s139, %s140
      %p144 = pneg %p138
      %p145 = scmp.eq.s32.totalorder %s19, 3
      %p146 = por %p144, %p145
      %p147 = scmp.ne.s32.totalorder %s139, %s142
      %p148 = scmp.eq.s32.totalorder %s19, 0
      %p149 = por %p147, %p148
      %p150 = scmp.ne.s32.totalorder %s139, %s142
      %p151 = scmp.eq.s32.totalorder %s24, 3
      %p152 = por %p150, %p151
      %p153 = scmp.ne.s32.totalorder %s142, %s143
      %p154 = scmp.eq.s32.totalorder %s24, 0
      %p155 = por %p153, %p154
      %p156 = scmp.ne.s32.totalorder %s142, %s143
      %p157 = scmp.eq.s32.totalorder %s25, 3
      %p158 = por %p156, %p157
      %p160 = scmp.ne.s32.totalorder %s143, %s159
      %p161 = scmp.eq.s32.totalorder %s25, 0
      %p162 = por %p160, %p161
      %p163 = scmp.le.s32.totalorder 1, %s19
      %p164 = scmp.lt.s32.totalorder %s19, 5
      %p165 = pnand %p163, %p164
      %p166 = pneg %p165
      // Predicated region
      $region9: #{pa_layer_nchw.1} parent=5 // pred_check
        _
      $region10: #{pa_layer_nchw.1} parent=5 // pred_check_branch
        %168 = sbr.rel (%p165) target = $region12
      $region11: #{pa_layer_nchw.1} parent=5 // pred_region
        %s169 = ssub.s32 %s19, 1
        // Predicated region
        $region13: #{pa_layer_nchw.1} parent=11 // pred_check
          %p170 = pneg %p66
        $region14: #{pa_layer_nchw.1} parent=11 // pred_check_branch
          %172 = sbr.rel (%p170) target = $region16
        $region15: #{pa_layer_nchw.1} parent=11 // pred_region
          _
        $region16: #{pa_layer_nchw.1} parent=11 // pred_fallthru
          _
        // Predicated region
        $region17: #{pa_layer_nchw.1} parent=11 // pred_check
          %p173 = pneg %p87
        $region18: #{pa_layer_nchw.1} parent=11 // pred_check_branch
          %175 = sbr.rel (%p173) target = $region20
        $region19: #{pa_layer_nchw.1} parent=11 // pred_region
          _
        $region20: #{pa_layer_nchw.1} parent=11 // pred_fallthru
          _
        // Predicated region
        $region21: #{pa_layer_nchw.1} parent=11 // pred_check
          %p176 = pneg %p108
        $region22: #{pa_layer_nchw.1} parent=11 // pred_check_branch
          %178 = sbr.rel (%p176) target = $region24
        $region23: #{pa_layer_nchw.1} parent=11 // pred_region
          _
        $region24: #{pa_layer_nchw.1} parent=11 // pred_fallthru
          _
        // Predicated region
        $region25: #{pa_layer_nchw.1} parent=11 // pred_check
          %p179 = pneg %p129
        $region26: #{pa_layer_nchw.1} parent=11 // pred_check_branch
          %181 = sbr.rel (%p179) target = $region28
        $region27: #{pa_layer_nchw.1} parent=11 // pred_region
          _
        $region28: #{pa_layer_nchw.1} parent=11 // pred_fallthru
          _
      $region12: #{pa_layer_nchw.1} parent=5 // pred_fallthru
        _
      %p182 = scmp.lt.s32.totalorder %s19, 4
      // Predicated region
      $region29: #{pa_layer_nchw.1} parent=5 // pred_check
        %p183 = pneg %p182
      $region30: #{pa_layer_nchw.1} parent=5 // pred_check_branch
        %185 = sbr.rel (%p183) target = $region32
      $region31: #{pa_layer_nchw.1} parent=5 // pred_region
        // Predicated region
        $region33: #{pa_layer_nchw.1} parent=31 // pred_check
          %p186 = pneg %p39
        $region34: #{pa_layer_nchw.1} parent=31 // pred_check_branch
          %188 = sbr.rel (%p186) target = $region36
        $region35: #{pa_layer_nchw.1} parent=31 // pred_region
          %s189 = sand.u32 %s29, 1
          %s190 = scalar_lea.sflag [#allocation4], %s189
          %s191 = sand.u32 %s29, 1
          %s192 = smul.addr %s191, 128
          %s193 = scalar_lea.vmem [#allocation3], %s192
          %s194 = smul.u32 16, %s19
          %s196 = ssub.s32 2048, 2048
          %197 = vsyncadd %s190, %s196
          %s198 = smul.addr %s194, 128
          %s199 = scalar_lea.hbm %s0, %s198
          %s200 = sshll.u32 %s193, 4
          %s201 = int_to_ptr.vmem [resolvable:$true] %s200
          %206 = dma.hbm_to_vmem [thread:$0]  %s199, 2048, %s201, %s190, 128, 128, 8
        $region36: #{pa_layer_nchw.1} parent=31 // pred_fallthru
          _
      $region32: #{pa_layer_nchw.1} parent=5 // pred_fallthru
        _
      %p207 = scmp.le.s32.totalorder 1, %s19
      %p208 = scmp.lt.s32.totalorder %s19, 5
      %p209 = pnand %p207, %p208
      %p210 = pneg %p209
      // Predicated region
      $region37: #{pa_layer_nchw.1} parent=5 // pred_check
        _
      $region38: #{pa_layer_nchw.1} parent=5 // pred_check_branch
        %212 = sbr.rel (%p209) target = $region40
      $region39: #{pa_layer_nchw.1} parent=5 // pred_region
        %s213 = ssub.s32 %s19, 1
        %s214 = sand.u32 %s32, 1
        %s215 = scalar_lea.sflag [#allocation4], %s214
        %s216 = sand.u32 %s32, 1
        %s217 = smul.addr %s216, 128
        %s218 = scalar_lea.vmem [#allocation3], %s217
        // Predicated region
        $region41: #{pa_layer_nchw.1} parent=39 // pred_check
          %p219 = pneg %p45
        $region42: #{pa_layer_nchw.1} parent=39 // pred_check_branch
          %221 = sbr.rel (%p219) target = $region44
        $region43: #{pa_layer_nchw.1} parent=39 // pred_region
          %222 = dma.done %s215, 2048
        $region44: #{pa_layer_nchw.1} parent=39 // pred_fallthru
          _
        %s223 = sand.u32 %s32, 1
        %s224 = scalar_lea.sflag [#allocation4], %s223
        %s225 = sand.u32 %s32, 1
        %s226 = smul.addr %s225, 128
        %s227 = scalar_lea.vmem [#allocation3], %s226
        %p228 = pneg %p45
        %p229 = pneg %p42
        %p230 = pneg %p66
        %p231 = pneg %p63
        %p232 = pneg %p87
        %p233 = pneg %p84
        %p234 = pneg %p108
        %p235 = pneg %p105
        %p236 = pneg %p129
        %p237 = pneg %p126
        %p238 = pneg %p155
        %p239 = pneg %p152
        %s240 = sand.u32 %s142, 1
        %s241 = scalar_lea.sflag [#allocation5], %s240
        %s242 = sand.u32 %s142, 1
        %s243 = smul.addr %s242, 128
        %s244 = scalar_lea.vmem [#allocation6], %s243
        %s245 = smul.u32 16, %s24
        %s246 = smul.u32 16, %s24
        %v248 = vld [vmem:[%s218] sm:$0xff]
        %v249 = vld [vmem:[%s218 + $0x8] sm:$0xff]
        %v250 = vld [vmem:[%s218 + $0x10] sm:$0xff]
        %v251 = vld [vmem:[%s218 + $0x18] sm:$0xff]
        %v252 = vld [vmem:[%s218 + $0x20] sm:$0xff]
        %v253 = vld [vmem:[%s218 + $0x28] sm:$0xff]
        %v254 = vld [vmem:[%s218 + $0x30] sm:$0xff]
        %v255 = vld [vmem:[%s218 + $0x38] sm:$0xff]
        %v256 = vld [vmem:[%s218 + $0x40] sm:$0xff]
        %v257 = vld [vmem:[%s218 + $0x48] sm:$0xff]
        %v258 = vld [vmem:[%s218 + $0x50] sm:$0xff]
        %v259 = vld [vmem:[%s218 + $0x58] sm:$0xff]
        %v260 = vld [vmem:[%s218 + $0x60] sm:$0xff]
        %v261 = vld [vmem:[%s218 + $0x68] sm:$0xff]
        %v262 = vld [vmem:[%s218 + $0x70] sm:$0xff]
        %v263 = vld [vmem:[%s218 + $0x78] sm:$0xff]
        %v264 = vpack.c.bf16 %v249, %v248
        %v265 = vpack.c.bf16 %v251, %v250
        %v266 = vpack.c.bf16 %v253, %v252
        %v267 = vpack.c.bf16 %v255, %v254
        %v268 = vpack.c.bf16 %v257, %v256
        %v269 = vpack.c.bf16 %v259, %v258
        %v270 = vpack.c.bf16 %v261, %v260
        %v271 = vpack.c.bf16 %v263, %v262
        %v272 = vld [vmem:[%s1] sm:$0xf]
        %v273 = vld [vmem:[%s1 + $0x4] sm:$0xf]
        %v274 = vld [vmem:[%s1 + $0x8] sm:$0xf]
        %v275 = vld [vmem:[%s1 + $0xc] sm:$0xf]
        %v276 = vld [vmem:[%s1 + $0x10] sm:$0xf]
        %v277 = vld [vmem:[%s1 + $0x14] sm:$0xf]
        %v278 = vld [vmem:[%s1 + $0x18] sm:$0xf]
        %v279 = vld [vmem:[%s1 + $0x1c] sm:$0xf]
        %v280 = vld [vmem:[%s2] sm:$0x1]
        %v282 = vlaneseq
        %v283 = vshrl.u32 %v282, 7
        %v284 = vsub.s32 0, %v283
        %v285 = vrot.slane %v280, %v284
        %v295 = vunpack.c.l.b16 %v272
        %v296 = vunpack.c.l.b16 %v273
        %v297 = vunpack.c.l.b16 %v274
        %v298 = vunpack.c.l.b16 %v275
        %v299 = vunpack.c.l.b16 %v276
        %v300 = vunpack.c.l.b16 %v277
        %v301 = vunpack.c.l.b16 %v278
        %v302 = vunpack.c.l.b16 %v279
        %v303 = vpack.c.b16 %v296, %v295
        %v304 = vpack.c.b16 %v298, %v297
        %v305 = vpack.c.b16 %v300, %v299
        %v306 = vpack.c.b16 %v302, %v301
        %vm311 = vcmask 523264
        %v313 = vsel %vm311, %v264, 0
        %v316 = vsel %vm311, %v265, 0
        %v319 = vsel %vm311, %v266, 0
        %v322 = vsel %vm311, %v267, 0
        %v325 = vsel %vm311, %v268, 0
        %v328 = vsel %vm311, %v269, 0
        %v331 = vsel %vm311, %v270, 0
        %v334 = vsel %vm311, %v271, 0
        %336 = vmatprep.subr.bf16.mxu0 0
        %337 = vmatpush1.bf16.msra.mxu0 %v303
        %338 = vmatprep.subr.bf16.mxu0 0
        %339 = vmatpush1.bf16.msra.mxu0 %v304
        %340 = vmatprep.subr.bf16.mxu0 0
        %341 = vmatpush1.bf16.msra.mxu0 %v305
        %342 = vmatprep.subr.bf16.mxu0 0
        %343 = vmatpush1.bf16.msra.mxu0 %v306
        %344 = vmatprep.subr.bf16.mxu0 0
        %345 = vmatpush1.bf16.msra.mxu0 0
        %346 = vmatprep.subr.bf16.mxu0 0
        %347 = vmatpush1.bf16.msra.mxu0 0
        %348 = vmatprep.subr.bf16.mxu0 0
        %349 = vmatpush1.bf16.msra.mxu0 0
        %350 = vmatprep.subr.bf16.mxu0 0
        %351 = vmatpush1.bf16.msra.mxu0 0
        %352 = vmatprep.subr.bf16.mxu0 0
        %353 = vmatpush1.bf16.msra.mxu0 0
        %354 = vmatprep.subr.bf16.mxu0 0
        %355 = vmatpush1.bf16.msra.mxu0 0
        %356 = vmatprep.subr.bf16.mxu0 0
        %357 = vmatpush1.bf16.msra.mxu0 0
        %358 = vmatprep.subr.bf16.mxu0 0
        %359 = vmatpush1.bf16.msra.mxu0 0
        %360 = vmatprep.subr.bf16.mxu0 0
        %361 = vmatpush1.bf16.msra.mxu0 0
        %362 = vmatprep.subr.bf16.mxu0 0
        %363 = vmatpush1.bf16.msra.mxu0 0
        %364 = vmatprep.subr.bf16.mxu0 0
        %365 = vmatpush1.bf16.msra.mxu0 0
        %366 = vmatprep.subr.bf16.mxu0 0
        %367 = vmatpush1.bf16.msra.mxu0 0
        %368 = vmatprep.mubr.bf16.mxu0 0
        %369 = vmatmul.mubr.bf16.gmra.mrb[0].mxu0 %v313
        %v370 = vpop.f32.mrb[0].mxu0
        %v371 = vadd.f32 %v285, %v370
        %v372 = vpop.f32.mrb[0].mxu0
        %v373 = vpop.f32.mrb[0].mxu0
        %v374 = vadd.f32 %v285, %v373
        %v375 = vpop.f32.mrb[0].mxu0
        %376 = vmatprep.mubr.bf16.mxu0 0
        %377 = vmatmul.mubr.bf16.gmra.mrb[0].mxu0 %v316
        %v378 = vpop.f32.mrb[0].mxu0
        %v379 = vadd.f32 %v285, %v378
        %v380 = vpop.f32.mrb[0].mxu0
        %v381 = vpop.f32.mrb[0].mxu0
        %v382 = vadd.f32 %v285, %v381
        %v383 = vpop.f32.mrb[0].mxu0
        %384 = vmatprep.mubr.bf16.mxu0 0
        %385 = vmatmul.mubr.bf16.gmra.mrb[0].mxu0 %v319
        %v386 = vpop.f32.mrb[0].mxu0
        %v387 = vadd.f32 %v285, %v386
        %v388 = vpop.f32.mrb[0].mxu0
        %v389 = vpop.f32.mrb[0].mxu0
        %v390 = vadd.f32 %v285, %v389
        %v391 = vpop.f32.mrb[0].mxu0
        %392 = vmatprep.mubr.bf16.mxu0 0
        %393 = vmatmul.mubr.bf16.gmra.mrb[0].mxu0 %v322
        %v394 = vpop.f32.mrb[0].mxu0
        %v395 = vadd.f32 %v285, %v394
        %v396 = vpop.f32.mrb[0].mxu0
        %v397 = vpop.f32.mrb[0].mxu0
        %v398 = vadd.f32 %v285, %v397
        %v399 = vpop.f32.mrb[0].mxu0
        %400 = vmatprep.mubr.bf16.mxu0 0
        %401 = vmatmul.mubr.bf16.gmra.mrb[0].mxu0 %v325
        %v402 = vpop.f32.mrb[0].mxu0
        %v403 = vadd.f32 %v285, %v402
        %v404 = vpop.f32.mrb[0].mxu0
        %v405 = vpop.f32.mrb[0].mxu0
        %v406 = vadd.f32 %v285, %v405
        %v407 = vpop.f32.mrb[0].mxu0
        %408 = vmatprep.mubr.bf16.mxu0 0
        %409 = vmatmul.mubr.bf16.gmra.mrb[0].mxu0 %v328
        %v410 = vpop.f32.mrb[0].mxu0
        %v411 = vadd.f32 %v285, %v410
        %v412 = vpop.f32.mrb[0].mxu0
        %v413 = vpop.f32.mrb[0].mxu0
        %v414 = vadd.f32 %v285, %v413
        %v415 = vpop.f32.mrb[0].mxu0
        %416 = vmatprep.mubr.bf16.mxu0 0
        %417 = vmatmul.mubr.bf16.gmra.mrb[0].mxu0 %v331
        %v418 = vpop.f32.mrb[0].mxu0
        %v419 = vadd.f32 %v285, %v418
        %v420 = vpop.f32.mrb[0].mxu0
        %v421 = vpop.f32.mrb[0].mxu0
        %v422 = vadd.f32 %v285, %v421
        %v423 = vpop.f32.mrb[0].mxu0
        %424 = vmatprep.mubr.bf16.mxu0 0
        %425 = vmatmul.mubr.bf16.gmra.mrb[0].mxu0 %v334
        %v426 = vpop.f32.mrb[0].mxu0
        %v427 = vadd.f32 %v285, %v426
        %v428 = vpop.f32.mrb[0].mxu0
        %v429 = vpop.f32.mrb[0].mxu0
        %v430 = vadd.f32 %v285, %v429
        %v431 = vpop.f32.mrb[0].mxu0
        %432 = vdwg.mxu0
        %v433 = vmax.f32 %v371, 0.0
        %v434 = vmax.f32 %v374, 0.0
        %v435 = vmax.f32 %v379, 0.0
        %v436 = vmax.f32 %v382, 0.0
        %v437 = vmax.f32 %v387, 0.0
        %v438 = vmax.f32 %v390, 0.0
        %v439 = vmax.f32 %v395, 0.0
        %v440 = vmax.f32 %v398, 0.0
        %v441 = vmax.f32 %v403, 0.0
        %v442 = vmax.f32 %v406, 0.0
        %v443 = vmax.f32 %v411, 0.0
        %v444 = vmax.f32 %v414, 0.0
        %v445 = vmax.f32 %v419, 0.0
        %v446 = vmax.f32 %v422, 0.0
        %v447 = vmax.f32 %v427, 0.0
        %v448 = vmax.f32 %v430, 0.0
        %v449 = vpack.c.bf16 %v434, %v433
        %v450 = vpack.c.bf16 %v436, %v435
        %v451 = vpack.c.bf16 %v438, %v437
        %v452 = vpack.c.bf16 %v440, %v439
        %v453 = vpack.c.bf16 %v442, %v441
        %v454 = vpack.c.bf16 %v444, %v443
        %v455 = vpack.c.bf16 %v446, %v445
        %v456 = vpack.c.bf16 %v448, %v447
        %v457 = vld [vmem:[%s3] sm:$0xf]
        %v458 = vld [vmem:[#allocation2] sm:$0x1]
        %v460 = vlaneseq
        %v461 = vshrl.u32 %v460, 7
        %v462 = vsub.s32 0, %v461
        %v463 = vrot.slane %v458, %v462
        %vm465 = vcmask 64512
        %v467 = vsel %vm465, %v449, 0
        %v470 = vsel %vm465, %v450, 0
        %v473 = vsel %vm465, %v451, 0
        %v476 = vsel %vm465, %v452, 0
        %v479 = vsel %vm465, %v453, 0
        %v482 = vsel %vm465, %v454, 0
        %v485 = vsel %vm465, %v455, 0
        %v488 = vsel %vm465, %v456, 0
        %vm490 = vcmask 1043456
        %v492 = vsel %vm490, %v457, 0
        %494 = vmatprep.subr.bf16.mxu0 0
        %495 = vmatpush1.bf16.msra.mxu0 %v492
        %496 = vmatprep.subr.bf16.mxu0 0
        %497 = vmatpush1.bf16.msra.mxu0 0
        %498 = vmatprep.subr.bf16.mxu0 0
        %499 = vmatpush1.bf16.msra.mxu0 0
        %500 = vmatprep.subr.bf16.mxu0 0
        %501 = vmatpush1.bf16.msra.mxu0 0
        %502 = vmatprep.subr.bf16.mxu0 0
        %503 = vmatpush1.bf16.msra.mxu0 0
        %504 = vmatprep.subr.bf16.mxu0 0
        %505 = vmatpush1.bf16.msra.mxu0 0
        %506 = vmatprep.subr.bf16.mxu0 0
        %507 = vmatpush1.bf16.msra.mxu0 0
        %508 = vmatprep.subr.bf16.mxu0 0
        %509 = vmatpush1.bf16.msra.mxu0 0
        %510 = vmatprep.subr.bf16.mxu0 0
        %511 = vmatpush1.bf16.msra.mxu0 0
        %512 = vmatprep.subr.bf16.mxu0 0
        %513 = vmatpush1.bf16.msra.mxu0 0
        %514 = vmatprep.subr.bf16.mxu0 0
        %515 = vmatpush1.bf16.msra.mxu0 0
        %516 = vmatprep.subr.bf16.mxu0 0
        %517 = vmatpush1.bf16.msra.mxu0 0
        %518 = vmatprep.subr.bf16.mxu0 0
        %519 = vmatpush1.bf16.msra.mxu0 0
        %520 = vmatprep.subr.bf16.mxu0 0
        %521 = vmatpush1.bf16.msra.mxu0 0
        %522 = vmatprep.subr.bf16.mxu0 0
        %523 = vmatpush1.bf16.msra.mxu0 0
        %524 = vmatprep.subr.bf16.mxu0 0
        %525 = vmatpush1.bf16.msra.mxu0 0
        %526 = vmatprep.mubr.bf16.mxu0 0
        %527 = vmatmul.mubr.bf16.gmra.mrb[0].mxu0 %v467
        %v528 = vpop.f32.mrb[0].mxu0
        %v529 = vadd.f32 %v463, %v528
        %v530 = vpop.f32.mrb[0].mxu0
        %v531 = vpop.f32.mrb[0].mxu0
        %v532 = vadd.f32 %v463, %v531
        %v533 = vpop.f32.mrb[0].mxu0
        %534 = vmatprep.mubr.bf16.mxu0 0
        %535 = vmatmul.mubr.bf16.gmra.mrb[0].mxu0 %v470
        %v536 = vpop.f32.mrb[0].mxu0
        %v537 = vadd.f32 %v463, %v536
        %v538 = vpop.f32.mrb[0].mxu0
        %v539 = vpop.f32.mrb[0].mxu0
        %v540 = vadd.f32 %v463, %v539
        %v541 = vpop.f32.mrb[0].mxu0
        %542 = vmatprep.mubr.bf16.mxu0 0
        %543 = vmatmul.mubr.bf16.gmra.mrb[0].mxu0 %v473
        %v544 = vpop.f32.mrb[0].mxu0
        %v545 = vadd.f32 %v463, %v544
        %v546 = vpop.f32.mrb[0].mxu0
        %v547 = vpop.f32.mrb[0].mxu0
        %v548 = vadd.f32 %v463, %v547
        %v549 = vpop.f32.mrb[0].mxu0
        %550 = vmatprep.mubr.bf16.mxu0 0
        %551 = vmatmul.mubr.bf16.gmra.mrb[0].mxu0 %v476
        %v552 = vpop.f32.mrb[0].mxu0
        %v553 = vadd.f32 %v463, %v552
        %v554 = vpop.f32.mrb[0].mxu0
        %v555 = vpop.f32.mrb[0].mxu0
        %v556 = vadd.f32 %v463, %v555
        %v557 = vpop.f32.mrb[0].mxu0
        %558 = vmatprep.mubr.bf16.mxu0 0
        %559 = vmatmul.mubr.bf16.gmra.mrb[0].mxu0 %v479
        %v560 = vpop.f32.mrb[0].mxu0
        %v561 = vadd.f32 %v463, %v560
        %v562 = vpop.f32.mrb[0].mxu0
        %v563 = vpop.f32.mrb[0].mxu0
        %v564 = vadd.f32 %v463, %v563
        %v565 = vpop.f32.mrb[0].mxu0
        %566 = vmatprep.mubr.bf16.mxu0 0
        %567 = vmatmul.mubr.bf16.gmra.mrb[0].mxu0 %v482
        %v568 = vpop.f32.mrb[0].mxu0
        %v569 = vadd.f32 %v463, %v568
        %v570 = vpop.f32.mrb[0].mxu0
        %v571 = vpop.f32.mrb[0].mxu0
        %v572 = vadd.f32 %v463, %v571
        %v573 = vpop.f32.mrb[0].mxu0
        %574 = vmatprep.mubr.bf16.mxu0 0
        %575 = vmatmul.mubr.bf16.gmra.mrb[0].mxu0 %v485
        %v576 = vpop.f32.mrb[0].mxu0
        %v577 = vadd.f32 %v463, %v576
        %v578 = vpop.f32.mrb[0].mxu0
        %v579 = vpop.f32.mrb[0].mxu0
        %v580 = vadd.f32 %v463, %v579
        %v581 = vpop.f32.mrb[0].mxu0
        %582 = vmatprep.mubr.bf16.mxu0 0
        %583 = vmatmul.mubr.bf16.gmra.mrb[0].mxu0 %v488
        %v584 = vpop.f32.mrb[0].mxu0
        %v585 = vadd.f32 %v463, %v584
        %v586 = vpop.f32.mrb[0].mxu0
        %v587 = vpop.f32.mrb[0].mxu0
        %v588 = vadd.f32 %v463, %v587
        %v589 = vpop.f32.mrb[0].mxu0
        %590 = vdwg.mxu0
        %v591 = vxor.u32 %v529, 2147483648
        %v592 = vxor.u32 %v532, 2147483648
        %v593 = vxor.u32 %v537, 2147483648
        %v594 = vxor.u32 %v540, 2147483648
        %v595 = vxor.u32 %v545, 2147483648
        %v596 = vxor.u32 %v548, 2147483648
        %v597 = vxor.u32 %v553, 2147483648
        %v598 = vxor.u32 %v556, 2147483648
        %v599 = vxor.u32 %v561, 2147483648
        %v600 = vxor.u32 %v564, 2147483648
        %v601 = vxor.u32 %v569, 2147483648
        %v602 = vxor.u32 %v572, 2147483648
        %v603 = vxor.u32 %v577, 2147483648
        %v604 = vxor.u32 %v580, 2147483648
        %v605 = vxor.u32 %v585, 2147483648
        %v606 = vxor.u32 %v588, 2147483648
        %v607 = vmul.f32 %v591, 1.442695
        %v608 = vpow.pop %v607
        %v609 = vmul.f32 %v592, 1.442695
        %v610 = vpow.pop %v609
        %v611 = vmul.f32 %v593, 1.442695
        %v612 = vpow.pop %v611
        %v613 = vmul.f32 %v594, 1.442695
        %v614 = vpow.pop %v613
        %v615 = vmul.f32 %v595, 1.442695
        %v616 = vpow.pop %v615
        %v617 = vmul.f32 %v596, 1.442695
        %v618 = vpow.pop %v617
        %v619 = vmul.f32 %v597, 1.442695
        %v620 = vpow.pop %v619
        %v621 = vmul.f32 %v598, 1.442695
        %v622 = vpow.pop %v621
        %v623 = vmul.f32 %v599, 1.442695
        %v624 = vpow.pop %v623
        %v625 = vmul.f32 %v600, 1.442695
        %v626 = vpow.pop %v625
        %v627 = vmul.f32 %v601, 1.442695
        %v628 = vpow.pop %v627
        %v629 = vmul.f32 %v602, 1.442695
        %v630 = vpow.pop %v629
        %v631 = vmul.f32 %v603, 1.442695
        %v632 = vpow.pop %v631
        %v633 = vmul.f32 %v604, 1.442695
        %v634 = vpow.pop %v633
        %v635 = vmul.f32 %v605, 1.442695
        %v636 = vpow.pop %v635
        %v637 = vmul.f32 %v606, 1.442695
        %v638 = vpow.pop %v637
        %v639 = vadd.f32 %v608, 1.0
        %v640 = vadd.f32 %v610, 1.0
        %v641 = vadd.f32 %v612, 1.0
        %v642 = vadd.f32 %v614, 1.0
        %v643 = vadd.f32 %v616, 1.0
        %v644 = vadd.f32 %v618, 1.0
        %v645 = vadd.f32 %v620, 1.0
        %v646 = vadd.f32 %v622, 1.0
        %v647 = vadd.f32 %v624, 1.0
        %v648 = vadd.f32 %v626, 1.0
        %v649 = vadd.f32 %v628, 1.0
        %v650 = vadd.f32 %v630, 1.0
        %v651 = vadd.f32 %v632, 1.0
        %v652 = vadd.f32 %v634, 1.0
        %v653 = vadd.f32 %v636, 1.0
        %v654 = vadd.f32 %v638, 1.0
        %v655 = vrcp.pop %v639
        %v656 = vmul.f32 1.0, %v655
        %v657 = vrcp.pop %v640
        %v658 = vmul.f32 1.0, %v657
        %v659 = vrcp.pop %v641
        %v660 = vmul.f32 1.0, %v659
        %v661 = vrcp.pop %v642
        %v662 = vmul.f32 1.0, %v661
        %v663 = vrcp.pop %v643
        %v664 = vmul.f32 1.0, %v663
        %v665 = vrcp.pop %v644
        %v666 = vmul.f32 1.0, %v665
        %v667 = vrcp.pop %v645
        %v668 = vmul.f32 1.0, %v667
        %v669 = vrcp.pop %v646
        %v670 = vmul.f32 1.0, %v669
        %v671 = vrcp.pop %v647
        %v672 = vmul.f32 1.0, %v671
        %v673 = vrcp.pop %v648
        %v674 = vmul.f32 1.0, %v673
        %v675 = vrcp.pop %v649
        %v676 = vmul.f32 1.0, %v675
        %v677 = vrcp.pop %v650
        %v678 = vmul.f32 1.0, %v677
        %v679 = vrcp.pop %v651
        %v680 = vmul.f32 1.0, %v679
        %v681 = vrcp.pop %v652
        %v682 = vmul.f32 1.0, %v681
        %v683 = vrcp.pop %v653
        %v684 = vmul.f32 1.0, %v683
        %v685 = vrcp.pop %v654
        %v686 = vmul.f32 1.0, %v685
        %688 = vset.pattern.permute.xlu0 0
        %689 = vperm.xlu0 %688, %v656
        %v690 = vpop.permute.xlu0 %689
        %693 = vset.pattern.permute.xlu0 0
        %694 = vperm.xlu0 %693, %v658
        %v695 = vpop.permute.xlu0 %694
        %698 = vset.pattern.permute.xlu0 0
        %699 = vperm.xlu0 %698, %v660
        %v700 = vpop.permute.xlu0 %699
        %703 = vset.pattern.permute.xlu0 0
        %704 = vperm.xlu0 %703, %v662
        %v705 = vpop.permute.xlu0 %704
        %708 = vset.pattern.permute.xlu0 0
        %709 = vperm.xlu0 %708, %v664
        %v710 = vpop.permute.xlu0 %709
        %713 = vset.pattern.permute.xlu0 0
        %714 = vperm.xlu0 %713, %v666
        %v715 = vpop.permute.xlu0 %714
        %718 = vset.pattern.permute.xlu0 0
        %719 = vperm.xlu0 %718, %v668
        %v720 = vpop.permute.xlu0 %719
        %723 = vset.pattern.permute.xlu0 0
        %724 = vperm.xlu0 %723, %v670
        %v725 = vpop.permute.xlu0 %724
        %728 = vset.pattern.permute.xlu0 0
        %729 = vperm.xlu0 %728, %v672
        %v730 = vpop.permute.xlu0 %729
        %733 = vset.pattern.permute.xlu0 0
        %734 = vperm.xlu0 %733, %v674
        %v735 = vpop.permute.xlu0 %734
        %738 = vset.pattern.permute.xlu0 0
        %739 = vperm.xlu0 %738, %v676
        %v740 = vpop.permute.xlu0 %739
        %743 = vset.pattern.permute.xlu0 0
        %744 = vperm.xlu0 %743, %v678
        %v745 = vpop.permute.xlu0 %744
        %748 = vset.pattern.permute.xlu0 0
        %749 = vperm.xlu0 %748, %v680
        %v750 = vpop.permute.xlu0 %749
        %753 = vset.pattern.permute.xlu0 0
        %754 = vperm.xlu0 %753, %v682
        %v755 = vpop.permute.xlu0 %754
        %758 = vset.pattern.permute.xlu0 0
        %759 = vperm.xlu0 %758, %v684
        %v760 = vpop.permute.xlu0 %759
        %763 = vset.pattern.permute.xlu0 0
        %764 = vperm.xlu0 %763, %v686
        %v765 = vpop.permute.xlu0 %764
        %v767 = vmul.f32 %v248, %v690
        %v768 = vmul.f32 %v249, %v695
        %v769 = vmul.f32 %v250, %v700
        %v770 = vmul.f32 %v251, %v705
        %v771 = vmul.f32 %v252, %v710
        %v772 = vmul.f32 %v253, %v715
        %v773 = vmul.f32 %v254, %v720
        %v774 = vmul.f32 %v255, %v725
        %v775 = vmul.f32 %v256, %v730
        %v776 = vmul.f32 %v257, %v735
        %v777 = vmul.f32 %v258, %v740
        %v778 = vmul.f32 %v259, %v745
        %v779 = vmul.f32 %v260, %v750
        %v780 = vmul.f32 %v261, %v755
        %v781 = vmul.f32 %v262, %v760
        %v782 = vmul.f32 %v263, %v765
        %783 = vst.msk [vmem:[%s244] sm:$0xff] %vm311, %v767
        %784 = vst.msk [vmem:[%s244 + $0x8] sm:$0xff] %vm311, %v768
        %785 = vst.msk [vmem:[%s244 + $0x10] sm:$0xff] %vm311, %v769
        %786 = vst.msk [vmem:[%s244 + $0x18] sm:$0xff] %vm311, %v770
        %787 = vst.msk [vmem:[%s244 + $0x20] sm:$0xff] %vm311, %v771
        %788 = vst.msk [vmem:[%s244 + $0x28] sm:$0xff] %vm311, %v772
        %789 = vst.msk [vmem:[%s244 + $0x30] sm:$0xff] %vm311, %v773
        %790 = vst.msk [vmem:[%s244 + $0x38] sm:$0xff] %vm311, %v774
        %791 = vst.msk [vmem:[%s244 + $0x40] sm:$0xff] %vm311, %v775
        %792 = vst.msk [vmem:[%s244 + $0x48] sm:$0xff] %vm311, %v776
        %793 = vst.msk [vmem:[%s244 + $0x50] sm:$0xff] %vm311, %v777
        %794 = vst.msk [vmem:[%s244 + $0x58] sm:$0xff] %vm311, %v778
        %795 = vst.msk [vmem:[%s244 + $0x60] sm:$0xff] %vm311, %v779
        %796 = vst.msk [vmem:[%s244 + $0x68] sm:$0xff] %vm311, %v780
        %797 = vst.msk [vmem:[%s244 + $0x70] sm:$0xff] %vm311, %v781
        %798 = vst.msk [vmem:[%s244 + $0x78] sm:$0xff] %vm311, %v782
        %s799 = sand.u32 %s142, 1
        %s800 = scalar_lea.sflag [#allocation5], %s799
        %s801 = sand.u32 %s142, 1
        %s802 = smul.addr %s801, 128
        %s803 = scalar_lea.vmem [#allocation6], %s802
        // Predicated region
        $region45: #{pa_layer_nchw.1} parent=39 // pred_check
          %p804 = pneg %p152
        $region46: #{pa_layer_nchw.1} parent=39 // pred_check_branch
          %806 = sbr.rel (%p804) target = $region48
        $region47: #{pa_layer_nchw.1} parent=39 // pred_region
          %s807 = smul.u32 16, %s24
          %s809 = ssub.s32 2048, 2048
          %810 = vsyncadd %s800, %s809
          %s811 = smul.addr %s807, 128
          %s812 = scalar_lea.hbm %s5, %s811
          %s813 = sshll.u32 %s803, 4
          %s814 = int_to_ptr.vmem [resolvable:$true] %s813
          %819 = dma.vmem_to_hbm [thread:$0]  %s814, 2048, %s812, %s800, 128, 128, 8
        $region48: #{pa_layer_nchw.1} parent=39 // pred_fallthru
          _
      $region40: #{pa_layer_nchw.1} parent=5 // pred_fallthru
        _
      %p820 = scmp.le.s32.totalorder 2, %s19
      // Predicated region
      $region49: #{pa_layer_nchw.1} parent=5 // pred_check
        %p821 = pneg %p820
      $region50: #{pa_layer_nchw.1} parent=5 // pred_check_branch
        %823 = sbr.rel (%p821) target = $region52
      $region51: #{pa_layer_nchw.1} parent=5 // pred_region
        %s824 = ssub.s32 %s19, 2
        // Predicated region
        $region53: #{pa_layer_nchw.1} parent=51 // pred_check
          %p825 = pneg %p158
        $region54: #{pa_layer_nchw.1} parent=51 // pred_check_branch
          %827 = sbr.rel (%p825) target = $region56
        $region55: #{pa_layer_nchw.1} parent=51 // pred_region
          %s828 = sand.u32 %s143, 1
          %s829 = scalar_lea.sflag [#allocation5], %s828
          %s830 = sand.u32 %s143, 1
          %s831 = smul.addr %s830, 128
          %s832 = scalar_lea.vmem [#allocation6], %s831
          %833 = dma.done %s829, 2048
        $region56: #{pa_layer_nchw.1} parent=51 // pred_fallthru
          _
      $region52: #{pa_layer_nchw.1} parent=5 // pred_fallthru
        _
    $region6: #{pa_layer_nchw.1} parent=1 // loop_footer
      %s23 = sadd.s32 1, %s19
    $region7: #{pa_layer_nchw.1} parent=1 // loop_footer_branch
      %18 = sbr.rel target = $region3
    $region8: #{pa_layer_nchw.1} parent=1 // loop_exit
      _
    %834 = vsyncpa [#allocation4], 1
    %s835 = scalar_lea.sflag [#allocation4], 1
    %836 = vsyncpa %s835, 1
    %837 = vsyncpa [#allocation5], 1
    %s838 = scalar_lea.sflag [#allocation5], 1
    %839 = vsyncpa %s838, 1

</llo_original>
